<compile_context>
chip_gen: v6e
topology: v6e:2x2x1
jax: 0.10.0
libtpu: 0.0.40
codegen_flags: <defaults>
</compile_context>

<pallas_src>
import functools
import math

import jax
import jax.numpy as jnp
from jax import lax
from jax.experimental import pallas as pl
from jax.experimental.pallas import tpu as pltpu

_LANE = 128
_SUBLANE = 8


def _round_up(x, m):
    return (x + m - 1) // m * m


# --------------------------------------------------------------------------
# Kernels
# --------------------------------------------------------------------------
def _vel_packed_kernel(dist_ref, denom_ref, expand_ref, eye_ref, out_ref, *,
                       min_safety_distance):
    """Lane-dense layout: one row = g whole batch slices (L = g*N*N lanes).

    dist_ref  : (TM, L)    f32 pairwise distances
    denom_ref : (TM, 3*gN) f32 per-agent ||v||+1e-6, split into 3 bf16-exact
                           components (hi | mid | lo)
    expand_ref: (3*gN, L)  f32 0/1 selection matrix (constant across steps)
    eye_ref   : (1, L)     f32 diagonal mask (constant across steps)
    """
    dist = dist_ref[...]
    # Per-element denominator via a tiny selection matmul on the MXU.  The
    # three bf16-exact components make the result bit-exact for any MXU
    # f32-emulation mode, so comparisons never flip vs. the reference.
    denom = jnp.dot(denom_ref[...], expand_ref[...],
                    preferred_element_type=jnp.float32)
    # Same op order as the PyTorch forward (exp goes to the EUP slot).
    collision_time = dist / denom
    adjusted = min_safety_distance * (1.0 + 2.0 * jnp.exp(-collision_time / 5.0))
    safe = (dist > adjusted) | (eye_ref[...] > 0.5)
    out_ref[...] = safe.astype(out_ref.dtype)


def _novel_packed_kernel(dist_ref, eye_ref, out_ref, *, min_safety_distance):
    dist = dist_ref[...]
    safe = (dist > min_safety_distance) | (eye_ref[...] > 0.5)
    out_ref[...] = safe.astype(out_ref.dtype)


def _vel_rows_kernel(dist_ref, denom_ref, diag_ref, out_ref, *,
                     min_safety_distance):
    """Row layout (N already lane-dense): dist (TM, N), denom/diag (TM, 1)."""
    dist = dist_ref[...]
    collision_time = dist / denom_ref[...]                   # (TM,1) broadcast
    adjusted = min_safety_distance * (1.0 + 2.0 * jnp.exp(-collision_time / 5.0))
    col = lax.broadcasted_iota(jnp.int32, dist.shape, 1)
    safe = (dist > adjusted) | (col == diag_ref[...])
    out_ref[...] = safe.astype(out_ref.dtype)


def _novel_rows_kernel(dist_ref, diag_ref, out_ref, *, min_safety_distance):
    dist = dist_ref[...]
    col = lax.broadcasted_iota(jnp.int32, dist.shape, 1)
    safe = (dist > min_safety_distance) | (col == diag_ref[...])
    out_ref[...] = safe.astype(out_ref.dtype)


# --------------------------------------------------------------------------
# Wrapper helpers
# --------------------------------------------------------------------------
def _vmem_capacity_bytes():
    """Best-effort per-core VMEM query with generation-aware fallback."""
    try:
        info = pltpu.get_tpu_info()
        cap = getattr(info, "vmem_capacity_bytes", None)
        if cap:
            return int(cap)
    except Exception:
        pass
    try:
        kind = jax.devices()[0].device_kind.lower()
        if "v7" in kind:
            return 64 * 1024 * 1024
        return 128 * 1024 * 1024            # v5e / v6e physical VMEM
    except Exception:
        return 64 * 1024 * 1024


def _pick_tile_rows(num_rows, per_row_bytes, const_bytes, target_vmem):
    """Biggest tile that fits the VMEM budget; never a 1-step grid when the
    work is big enough to feed both v7x TensorCores."""
    tm = max(_SUBLANE, (target_vmem - const_bytes) // max(per_row_bytes, 1))
    tm = max(_SUBLANE, (tm // _SUBLANE) * _SUBLANE)
    if tm >= num_rows:
        if num_rows >= 2 * _SUBLANE:
            tm = _round_up(pl.cdiv(num_rows, 2), _SUBLANE)   # >= 2 grid steps
        else:
            tm = num_rows                                    # full-extent block
    return tm


# --------------------------------------------------------------------------
# Forward
# --------------------------------------------------------------------------
def collision_constraint_processor(distance_matrix, velocities=None,
                                   min_safety_distance=5.0):
    """JAX/Pallas equivalent of CollisionConstraintProcessor.forward.

    Args:
        distance_matrix: (B, N, N) float32 pairwise distances
        velocities:      optional (B, N, D) float32
    Returns:
        (B, N, N) float32 collision mask (1 = safe, 0 = potential collision)
    """
    distance_matrix = distance_matrix.astype(jnp.float32)
    B, N, _ = distance_matrix.shape
    has_vel = velocities is not None
    msd = float(min_safety_distance)

    if has_vel:
        v = velocities.astype(jnp.float32)
        denom_bn = jnp.linalg.norm(v, axis=-1) + 1e-06       # (B, N)

    vmem_cap = _vmem_capacity_bytes()
    target_vmem = max(4 << 20, min(32 << 20, vmem_cap // 4))
    vmem_limit = int(min(vmem_cap * 3 // 4, max(32 << 20, 2 * target_vmem)))
    compiler_params = pltpu.CompilerParams(
        dimension_semantics=("parallel",),
        vmem_limit_bytes=vmem_limit,
    )

    # ---- lane-dense packed layout for small N ------------------------------
    pack = (N < _LANE) and ((not has_vel) or (N <= 64))
    if pack:
        g0 = max(1, -(-_LANE // (N * N)))        # ceil(128 / N^2)
        g = math.gcd(B, g0)                      # batches folded per kernel row
        L = g * N * N                            # lane width of one kernel row
        R = B // g                               # kernel rows
        dist2d = distance_matrix.reshape(R, L)   # free reshape (no HBM copy)

        q = jnp.arange(L, dtype=jnp.int32)
        eye_mask = (((q % (N * N)) % (N + 1)) == 0).astype(jnp.float32)
        eye_mask = eye_mask.reshape(1, L)        # same pattern for every row

        lane_L = _round_up(L, _LANE)
        out_shape = jax.ShapeDtypeStruct((R, L), jnp.float32)
        dist_spec = pl.BlockSpec((None, L), lambda r: (r, 0))  # placeholder, set below
        eye_spec = pl.BlockSpec((1, L), lambda r: (0, 0))

        if has_vel:
            gN = g * N
            denom2d = denom_bn.reshape(R, gN)
            # bf16-exact 3-way split so the in-kernel selection matmul
            # reproduces the f32 denominator bitwise.
            d_hi = denom2d.astype(jnp.bfloat16).astype(jnp.float32)
            r1 = denom2d - d_hi
            d_md = r1.astype(jnp.bfloat16).astype(jnp.float32)
            d_lo = r1 - d_md
            denom_split = jnp.concatenate([d_hi, d_md, d_lo], axis=1)  # (R, 3gN)

            agents = jnp.arange(gN, dtype=jnp.int32)
            expand1 = ((q[None, :] // N) == agents[:, None]).astype(jnp.float32)
            expand3 = jnp.concatenate([expand1, expand1, expand1], axis=0)  # (3gN, L)

            const_bytes = 2 * 4 * lane_L * (_round_up(3 * gN, _SUBLANE) + _SUBLANE)
            per_row = 2 * 4 * (2 * lane_L + _round_up(3 * gN, _LANE))
            tm = _pick_tile_rows(R, per_row, const_bytes, target_vmem)
            grid = (pl.cdiv(R, tm),)             # ragged last block: no pad/slice

            dist_spec = pl.BlockSpec((tm, L), lambda r: (r, 0))
            out_spec = pl.BlockSpec((tm, L), lambda r: (r, 0))
            denom_spec = pl.BlockSpec((tm, 3 * gN), lambda r: (r, 0))
            expand_spec = pl.BlockSpec((3 * gN, L), lambda r: (0, 0))

            kernel = functools.partial(_vel_packed_kernel,
                                       min_safety_distance=msd)
            out2d = pl.pallas_call(
                kernel,
                out_shape=out_shape,
                grid=grid,
                in_specs=[dist_spec, denom_spec, expand_spec, eye_spec],
                out_specs=out_spec,
                compiler_params=compiler_params,
            )(dist2d, denom_split, expand3, eye_mask)
        else:
            const_bytes = 2 * 4 * lane_L * _SUBLANE
            per_row = 2 * 4 * (2 * lane_L)
            tm = _pick_tile_rows(R, per_row, const_bytes, target_vmem)
            grid = (pl.cdiv(R, tm),)

            dist_spec = pl.BlockSpec((tm, L), lambda r: (r, 0))
            out_spec = pl.BlockSpec((tm, L), lambda r: (r, 0))

            kernel = functools.partial(_novel_packed_kernel,
                                       min_safety_distance=msd)
            out2d = pl.pallas_call(
                kernel,
                out_shape=out_shape,
                grid=grid,
                in_specs=[dist_spec, eye_spec],
                out_specs=out_spec,
                compiler_params=compiler_params,
            )(dist2d, eye_mask)

        return out2d.reshape(B, N, N)

    # ---- row layout (N already lane-dense enough) ---------------------------
    M = B * N
    dist2d = distance_matrix.reshape(M, N)       # free reshape
    # Tiny (M, 1) diagonal-column stream: < 1/N of the dist traffic for the
    # large-N shapes that take this path (kept instead of an in-kernel mod).
    diag_col = (jnp.arange(M, dtype=jnp.int32) % N).reshape(M, 1)

    lane_N = _round_up(N, _LANE)
    n_small = 2 if has_vel else 1
    per_row = 2 * 4 * (2 * lane_N + n_small * _LANE)
    tm = _pick_tile_rows(M, per_row, 0, target_vmem)
    grid = (pl.cdiv(M, tm),)                     # ragged last block: no pad/slice

    dist_spec = pl.BlockSpec((tm, N), lambda r: (r, 0))
    out_spec = pl.BlockSpec((tm, N), lambda r: (r, 0))
    col1_spec = pl.BlockSpec((tm, 1), lambda r: (r, 0))
    out_shape = jax.ShapeDtypeStruct((M, N), jnp.float32)

    if has_vel:
        denom2d = denom_bn.reshape(M, 1)
        kernel = functools.partial(_vel_rows_kernel, min_safety_distance=msd)
        out2d = pl.pallas_call(
            kernel,
            out_shape=out_shape,
            grid=grid,
            in_specs=[dist_spec, col1_spec, col1_spec],
            out_specs=out_spec,
            compiler_params=compiler_params,
        )(dist2d, denom2d, diag_col)
    else:
        kernel = functools.partial(_novel_rows_kernel, min_safety_distance=msd)
        out2d = pl.pallas_call(
            kernel,
            out_shape=out_shape,
            grid=grid,
            in_specs=[dist_spec, col1_spec],
            out_specs=out_spec,
            compiler_params=compiler_params,
        )(dist2d, diag_col)

    return out2d.reshape(B, N, N)


# --------------------------------------------------------------------------
# Parity-only parameters (safety_margin_net is never used in forward()).
# --------------------------------------------------------------------------
def init_safety_margin_net_params(key):
    """Linear(6,32) -> ReLU -> Linear(32,1) -> Sigmoid; unused by forward."""
    k1, k2, k3, k4 = jax.random.split(key, 4)
    return {
        "w1": jax.random.normal(k1, (6, 32), jnp.float32) * 0.1,
        "b1": jax.random.normal(k2, (32,), jnp.float32) * 0.01,
        "w2": jax.random.normal(k3, (32, 1), jnp.float32) * 0.1,
        "b2": jax.random.normal(k4, (1,), jnp.float32) * 0.01,
    }


# --------------------------------------------------------------------------
# Pure-JAX reference (mirrors the PyTorch forward)
# --------------------------------------------------------------------------
def _reference(distance_matrix, velocities=None, min_safety_distance=5.0):
    safe_mask = (distance_matrix > min_safety_distance).astype(jnp.float32)
    if velocities is not None:
        vel_mag = jnp.linalg.norm(velocities, axis=-1, keepdims=True)
        ct = distance_matrix / (vel_mag + 1e-06)
        margin = 1.0 + 2.0 * jnp.exp(-ct / 5.0)
        adj = min_safety_distance * margin
        safe_mask = (distance_matrix > adj).astype(jnp.float32)
    n = distance_matrix.shape[-1]
    eye = jnp.eye(n, dtype=jnp.float32)[None]
    return jnp.clip(safe_mask + eye, 0.0, 1.0)


if __name__ == "__main__":
    key = jax.random.PRNGKey(0)
    k_d, k_v, k_p, k_d2, k_v2 = jax.random.split(key, 5)

    B, N, D = 2, 8, 3
    # positive pairwise-style distances in [0, 30) meters, symmetric, zero diag
    distance_matrix = jax.random.uniform(k_d, (B, N, N), jnp.float32) * 30.0
    distance_matrix = 0.5 * (distance_matrix + jnp.swapaxes(distance_matrix, 1, 2))
    distance_matrix = distance_matrix * (1.0 - jnp.eye(N, dtype=jnp.float32)[None])
    velocities = jax.random.normal(k_v, (B, N, D), jnp.float32) * 2.0

    # parity-only parameters (unused in forward)
    _ = init_safety_margin_net_params(k_p)

    # with velocities (packed lane-dense path)
    out = jax.block_until_ready(collision_constraint_processor(distance_matrix, velocities))
    ref = _reference(distance_matrix, velocities)
    assert out.shape == (B, N, N)
    assert jnp.allclose(out, ref, atol=1e-6), "mismatch (velocities path)"

    # without velocities
    out2 = jax.block_until_ready(collision_constraint_processor(distance_matrix, None))
    ref2 = _reference(distance_matrix, None)
    assert jnp.allclose(out2, ref2, atol=1e-6), "mismatch (no-velocity path)"

    # multi-step grid + ragged last block (20 packed rows -> blocks of 16 / 4)
    B2 = 40
    dm2 = jax.random.uniform(k_d2, (B2, N, N), jnp.float32) * 30.0
    vel2 = jax.random.normal(k_v2, (B2, N, D), jnp.float32) * 2.0
    out3 = jax.block_until_ready(collision_constraint_processor(dm2, vel2))
    assert jnp.allclose(out3, _reference(dm2, vel2), atol=1e-6), "mismatch (ragged grid)"

    print("KERNEL_OK")
</pallas_src>

<mosaic_0001>
module attributes {stable_mosaic.version = 11 : i64} {
  func.func @_vel_packed_kernel(%arg0: i32, %arg1: memref<1x128xf32, #tpu.memory_space<vmem>>, %arg2: memref<1x48xf32, #tpu.memory_space<vmem>>, %arg3: memref<48x128xf32, #tpu.memory_space<vmem>>, %arg4: memref<1x128xf32, #tpu.memory_space<vmem>>, %arg5: memref<1x128xf32, #tpu.memory_space<vmem>>) attributes {dimension_semantics = [#tpu.dimension_semantics<parallel>], iteration_bounds = array<i64: 1>, scalar_prefetch = 0 : i64, scratch_operands = 0 : i64, tpu.core_type = #tpu.core_type<tc>, window_params = [{transform_indices = @transform_0, window_bounds = array<i64: 1, 128>}, {transform_indices = @transform_1, window_bounds = array<i64: 1, 48>}, {pipeline_mode = #tpu.pipeline_mode<synchronous>, transform_indices = @transform_2, window_bounds = array<i64: 48, 128>}, {pipeline_mode = #tpu.pipeline_mode<synchronous>, transform_indices = @transform_3, window_bounds = array<i64: 1, 128>}, {transform_indices = @transform_4, window_bounds = array<i64: 1, 128>}]} {
    %c0 = arith.constant 0 : index
    %c0_0 = arith.constant 0 : index
    %0 = vector.load %arg1[%c0, %c0_0] : memref<1x128xf32, #tpu.memory_space<vmem>>, vector<1x128xf32>
    %c0_1 = arith.constant 0 : index
    %c0_2 = arith.constant 0 : index
    %1 = vector.load %arg2[%c0_1, %c0_2] : memref<1x48xf32, #tpu.memory_space<vmem>>, vector<1x48xf32>
    %c0_3 = arith.constant 0 : index
    %c0_4 = arith.constant 0 : index
    %2 = vector.load %arg3[%c0_3, %c0_4] : memref<48x128xf32, #tpu.memory_space<vmem>>, vector<48x128xf32>
    %cst = arith.constant dense<0.000000e+00> : vector<1x128xf32>
    %3 = tpu.matmul %1, %2, %cst {dimension_numbers = #tpu.dot_dimension_numbers<[1], [0], [0], [1], [0, 0, 1, 1], [], []>} : vector<1x48xf32>, vector<48x128xf32>, vector<1x128xf32> -> vector<1x128xf32>
    %4 = arith.divf %0, %3 : vector<1x128xf32>
    %cst_5 = arith.constant 0.000000e+00 : f32
    %5 = vector.broadcast %cst_5 : f32 to vector<1x128xf32>
    %6 = arith.subf %5, %4 : vector<1x128xf32>
    %cst_6 = arith.constant 5.000000e+00 : f32
    %7 = vector.broadcast %cst_6 : f32 to vector<1x128xf32>
    %8 = arith.divf %6, %7 : vector<1x128xf32>
    %9 = math.exp %8 : vector<1x128xf32>
    %cst_7 = arith.constant 2.000000e+00 : f32
    %10 = vector.broadcast %cst_7 : f32 to vector<1x128xf32>
    %11 = arith.mulf %10, %9 : vector<1x128xf32>
    %cst_8 = arith.constant 1.000000e+00 : f32
    %12 = vector.broadcast %cst_8 : f32 to vector<1x128xf32>
    %13 = arith.addf %12, %11 : vector<1x128xf32>
    %cst_9 = arith.constant 5.000000e+00 : f32
    %14 = vector.broadcast %cst_9 : f32 to vector<1x128xf32>
    %15 = arith.mulf %14, %13 : vector<1x128xf32>
    %16 = arith.cmpf ogt, %0, %15 : vector<1x128xf32>
    %c0_10 = arith.constant 0 : index
    %c0_11 = arith.constant 0 : index
    %17 = vector.load %arg4[%c0_10, %c0_11] : memref<1x128xf32, #tpu.memory_space<vmem>>, vector<1x128xf32>
    %cst_12 = arith.constant 5.000000e-01 : f32
    %18 = vector.broadcast %cst_12 : f32 to vector<1x128xf32>
    %19 = arith.cmpf ogt, %17, %18 : vector<1x128xf32>
    %20 = arith.ori %16, %19 : vector<1x128xi1>
    %21 = arith.extui %20 : vector<1x128xi1> to vector<1x128xi32>
    %22 = arith.sitofp %21 : vector<1x128xi32> to vector<1x128xf32>
    %c0_13 = arith.constant 0 : index
    %c0_14 = arith.constant 0 : index
    %23 = vector.load %arg5[%c0_13, %c0_14] : memref<1x128xf32, #tpu.memory_space<vmem>>, vector<1x128xf32>
    tpu.vector_store %arg5[%c0_13, %c0_14], %22 {strides = array<i32>} : memref<1x128xf32, #tpu.memory_space<vmem>>, vector<1x128xf32>,
    return
  }
  func.func @transform_0(%arg0: i32) -> (i32, i32) {
    %c0_i32 = arith.constant 0 : i32
    %c0_i32_0 = arith.constant 0 : i32
    return %arg0, %c0_i32 : i32, i32
  }
  func.func @transform_1(%arg0: i32) -> (i32, i32) {
    %c0_i32 = arith.constant 0 : i32
    %c0_i32_0 = arith.constant 0 : i32
    return %arg0, %c0_i32 : i32, i32
  }
  func.func @transform_2(%arg0: i32) -> (i32, i32) {
    %c0_i32 = arith.constant 0 : i32
    %c0_i32_0 = arith.constant 0 : i32
    %c0_i32_1 = arith.constant 0 : i32
    return %c0_i32, %c0_i32_0 : i32, i32
  }
  func.func @transform_3(%arg0: i32) -> (i32, i32) {
    %c0_i32 = arith.constant 0 : i32
    %c0_i32_0 = arith.constant 0 : i32
    %c0_i32_1 = arith.constant 0 : i32
    return %c0_i32, %c0_i32_0 : i32, i32
  }
  func.func @transform_4(%arg0: i32) -> (i32, i32) {
    %c0_i32 = arith.constant 0 : i32
    %c0_i32_0 = arith.constant 0 : i32
    return %arg0, %c0_i32 : i32, i32
  }
}

</mosaic_0001>

<llo_original>
// kernel: tpu_custom_call.1
$region0: #{tpu_custom_call.1}
  #allocation0 [shape = 'u32[]', space=smem, size = 0x4, offset = 0x4, fixed_abs, tag = 'smem constant byte address 0x4 - core index']
  #allocation1 [shape = 'u32[144,128]{1,0:T(1,128)}', space=vmem, size = 0x12000, scoped, tag = 'internal scratch']
  %s0 = inlined_call_operand.hbm [shape: f32[1,128], index: 0, kind: input, shape index: {}]
  %s1 = inlined_call_operand.vmem [shape: f32[1,48], index: 1, kind: input, shape index: {}]
  %s2 = inlined_call_operand.hbm [shape: f32[48,128], index: 2, kind: input, shape index: {}]
  %s3 = inlined_call_operand.vmem [shape: f32[1,128], index: 3, kind: input, shape index: {}]
  %s4 = inlined_call_operand.hbm [shape: f32[1,128], index: 4, kind: output, shape index: {}]
  %s5 = sld [smem:[#allocation0]]
  $region34: #{tpu_custom_call.1} parent=0
    _
  %s7 = ssub.s32 1, %s5
  %s8 = scalar_select 0, %s7, %s5
  $region1: #{tpu_custom_call.1} parent=0
    #allocation2 [shape = 'u8[512]{0}', space=vmem, size = 0x400, scoped, tag = 'input window, operand 0, single buffered']
    #allocation3 [shape = 's32[1]{0}', space=sflag, size = 0x4, scoped, tag = 'scoped memory for tpu_custom_call.1']
    #allocation4 [shape = 's32[1]{0}', space=sflag, size = 0x4, scoped, tag = 'scoped memory for tpu_custom_call.1']
    #allocation5 [shape = 'u8[24576]{0}', space=vmem, size = 0x6000, scoped, tag = 'input window, operand 2, single buffered']
    #allocation6 [shape = 's32[1]{0}', space=sflag, size = 0x4, scoped, tag = 'scoped memory for tpu_custom_call.1']
    #allocation7 [shape = 'u8[512]{0}', space=vmem, size = 0x400, scoped, tag = 'output window, operand 0, single buffered']
    %9 = vsyncpa [#allocation3], 0
    %10 = vsyncpa [#allocation6], 0
    %11 = vsyncpa [#allocation4], 0
    // Predicated region
    $region2: #{tpu_custom_call.1} parent=1 // pred_check
      _
    $region3: #{tpu_custom_call.1} parent=1 // pred_check_branch
      %13 = sbr.rel (0) target = $region5
    $region4: #{tpu_custom_call.1} parent=1 // pred_region
      %s15 = ssub.s32 16, 16
      %16 = vsyncadd [#allocation3], %s15
      %s18 = sshll.u32 [#allocation2], 4
      %s19 = int_to_ptr.vmem [resolvable:$true] %s18
      %21 = dma.hbm_to_vmem [thread:$0]  %s0, 16, %s19, [#allocation3]
    $region5: #{tpu_custom_call.1} parent=1 // pred_fallthru
      _
    // Predicated region
    $region6: #{tpu_custom_call.1} parent=1 // pred_check
      _
    $region7: #{tpu_custom_call.1} parent=1 // pred_check_branch
      %23 = sbr.rel (0) target = $region9
    $region8: #{tpu_custom_call.1} parent=1 // pred_region
      _
    $region9: #{tpu_custom_call.1} parent=1 // pred_fallthru
      _
    // Predicated region
    $region10: #{tpu_custom_call.1} parent=1 // pred_check
      _
    $region11: #{tpu_custom_call.1} parent=1 // pred_check_branch
      %25 = sbr.rel (0) target = $region13
    $region12: #{tpu_custom_call.1} parent=1 // pred_region
      %s27 = ssub.s32 768, 768
      %28 = vsyncadd [#allocation6], %s27
      %s29 = sshll.u32 [#allocation5], 4
      %s30 = int_to_ptr.vmem [resolvable:$true] %s29
      %35 = dma.hbm_to_vmem [thread:$0]  %s2, 768, %s30, [#allocation6], 128, 128, 8
    $region13: #{tpu_custom_call.1} parent=1 // pred_fallthru
      _
    // Predicated region
    $region14: #{tpu_custom_call.1} parent=1 // pred_check
      _
    $region15: #{tpu_custom_call.1} parent=1 // pred_check_branch
      %37 = sbr.rel (0) target = $region17
    $region16: #{tpu_custom_call.1} parent=1 // pred_region
      _
    $region17: #{tpu_custom_call.1} parent=1 // pred_fallthru
      _
    // Predicated region
    $region18: #{tpu_custom_call.1} parent=1 // pred_check
      _
    $region19: #{tpu_custom_call.1} parent=1 // pred_check_branch
      %39 = sbr.rel (0) target = $region21
    $region20: #{tpu_custom_call.1} parent=1 // pred_region
      %40 = dma.done [#allocation3], 16
    $region21: #{tpu_custom_call.1} parent=1 // pred_fallthru
      _
    // Predicated region
    $region22: #{tpu_custom_call.1} parent=1 // pred_check
      _
    $region23: #{tpu_custom_call.1} parent=1 // pred_check_branch
      %42 = sbr.rel (0) target = $region25
    $region24: #{tpu_custom_call.1} parent=1 // pred_region
      %43 = dma.done [#allocation6], 768
    $region25: #{tpu_custom_call.1} parent=1 // pred_fallthru
      _
    %v44 = vld [vmem:[#allocation2] sm:$0x1]
    %v45 = vld [vmem:[%s1] sm:$0x1]
    %v46 = vld [vmem:[#allocation5] sm:$0xff]
    %v47 = vld [vmem:[#allocation5 + $0x8] sm:$0xff]
    %v48 = vld [vmem:[#allocation5 + $0x10] sm:$0xff]
    %v49 = vld [vmem:[#allocation5 + $0x18] sm:$0xff]
    %v50 = vld [vmem:[#allocation5 + $0x20] sm:$0xff]
    %v51 = vld [vmem:[#allocation5 + $0x28] sm:$0xff]
    %vm52 = vcmask 392192
    %v54 = vsel %vm52, %v45, 0
    %56 = vmatprep.subr.mxu0 0.0
    %57 = vmatpush1.msra.mxu0 0.0
    %58 = vmatprep.subr.mxu0 0.0
    %59 = vmatpush1.msra.mxu0 0.0
    %60 = vmatprep.subr.mxu0 0.0
    %61 = vmatpush1.msra.mxu0 0.0
    %62 = vmatprep.subr.mxu0 0.0
    %63 = vmatpush1.msra.mxu0 0.0
    %64 = vmatprep.subr.mxu0 0.0
    %65 = vmatpush1.msra.mxu0 0.0
    %66 = vmatprep.subr.mxu0 0.0
    %67 = vmatpush1.msra.mxu0 0.0
    %68 = vmatprep.subr.mxu0 0.0
    %69 = vmatpush1.msra.mxu0 0.0
    %70 = vmatprep.subr.mxu0 0.0
    %71 = vmatpush1.msra.mxu0 0.0
    %72 = vmatprep.subr.mxu0 0.0
    %73 = vmatpush1.msra.mxu0 0.0
    %74 = vmatprep.subr.mxu0 0.0
    %75 = vmatpush1.msra.mxu0 0.0
    %76 = vmatprep.subr.mxu0 0.0
    %77 = vmatpush1.msra.mxu0 %v51
    %78 = vmatprep.subr.mxu0 0.0
    %79 = vmatpush1.msra.mxu0 %v50
    %80 = vmatprep.subr.mxu0 0.0
    %81 = vmatpush1.msra.mxu0 %v49
    %82 = vmatprep.subr.mxu0 0.0
    %83 = vmatpush1.msra.mxu0 %v48
    %84 = vmatprep.subr.mxu0 0.0
    %85 = vmatpush1.msra.mxu0 %v47
    %86 = vmatprep.subr.mxu0 0.0
    %87 = vmatpush1.msra.mxu0 %v46
    %88 = vmatprep.subr.mxu0 0.0
    %89 = vmatpush2.msra.mxu0 0.0
    %90 = vmatprep.subr.mxu0 0.0
    %91 = vmatpush2.msra.mxu0 0.0
    %92 = vmatprep.subr.mxu0 0.0
    %93 = vmatpush2.msra.mxu0 0.0
    %94 = vmatprep.subr.mxu0 0.0
    %95 = vmatpush2.msra.mxu0 0.0
    %96 = vmatprep.subr.mxu0 0.0
    %97 = vmatpush2.msra.mxu0 0.0
    %98 = vmatprep.subr.mxu0 0.0
    %99 = vmatpush2.msra.mxu0 0.0
    %100 = vmatprep.subr.mxu0 0.0
    %101 = vmatpush2.msra.mxu0 0.0
    %102 = vmatprep.subr.mxu0 0.0
    %103 = vmatpush2.msra.mxu0 0.0
    %104 = vmatprep.subr.mxu0 0.0
    %105 = vmatpush2.msra.mxu0 0.0
    %106 = vmatprep.subr.mxu0 0.0
    %107 = vmatpush2.msra.mxu0 0.0
    %108 = vmatprep.subr.mxu0 0.0
    %109 = vmatpush2.msra.mxu0 0.0
    %110 = vmatprep.subr.mxu0 0.0
    %111 = vmatpush2.msra.mxu0 0.0
    %112 = vmatprep.subr.mxu0 0.0
    %113 = vmatpush2.msra.mxu0 0.0
    %114 = vmatprep.subr.mxu0 0.0
    %115 = vmatpush2.msra.mxu0 0.0
    %116 = vmatprep.subr.mxu0 0.0
    %117 = vmatpush2.msra.mxu0 0.0
    %118 = vmatprep.subr.mxu0 0.0
    %119 = vmatpush2.msra.mxu0 0.0
    %120 = vmatprep.mubr.f32.mxu0 0.0
    %121 = vmatmul.mubr.f32.gmra.mxu0 %v54
    %v122 = vpop.f32.mrf.mxu0
    %v123 = vadd.f32 0.0, %v122
    %v124 = vpop.f32.mrf.mxu0
    %125 = vdwg.mxu0
    %v126 = vrcp.pop %v123
    %v127 = vmul.f32 %v44, %v126
    %v128 = vsub.f32 0.0, %v127
    %v129 = vrcp.pop 5.0
    %v130 = vmul.f32 %v128, %v129
    %v131 = vmul.f32 %v130, 1.442695
    %v132 = vpow.pop %v131
    %v133 = vmul.f32 %v132, 2.0
    %v134 = vadd.f32 %v133, 1.0
    %v135 = vmul.f32 %v134, 5.0
    %vm136 = vcmp.gt.f32.partialorder %v44, %v135
    %v137 = vld [vmem:[%s3] sm:$0x1]
    %vm138 = vcmp.gt.f32.partialorder %v137, 0.5
    %vm139 = vmor %vm136, %vm138
    %v140 = vsel %vm139, 1, 0
    %v141 = vcvt.s32.f32 %v140
    %142 = vst [vmem:[#allocation7] sm:$0x1] %v141
    // Predicated region
    $region26: #{tpu_custom_call.1} parent=1 // pred_check
      _
    $region27: #{tpu_custom_call.1} parent=1 // pred_check_branch
      %144 = sbr.rel (0) target = $region29
    $region28: #{tpu_custom_call.1} parent=1 // pred_region
      %s146 = ssub.s32 16, 16
      %147 = vsyncadd [#allocation4], %s146
      %s149 = sshll.u32 [#allocation7], 4
      %s150 = int_to_ptr.vmem [resolvable:$true] %s149
      %152 = dma.vmem_to_hbm [thread:$0]  %s150, 16, %s4, [#allocation4]
    $region29: #{tpu_custom_call.1} parent=1 // pred_fallthru
      _
    // Predicated region
    $region30: #{tpu_custom_call.1} parent=1 // pred_check
      _
    $region31: #{tpu_custom_call.1} parent=1 // pred_check_branch
      %154 = sbr.rel (0) target = $region33
    $region32: #{tpu_custom_call.1} parent=1 // pred_region
      %155 = dma.done [#allocation4], 16
    $region33: #{tpu_custom_call.1} parent=1 // pred_fallthru
      _
    %156 = vsyncpa [#allocation3], 1
    %157 = vsyncpa [#allocation6], 1
    %158 = vsyncpa [#allocation4], 1

</llo_original>
